<compile_context>
chip_gen: v5e
topology: v5e:2x2
jax: 0.10.0
libtpu: 0.0.40
codegen_flags: <defaults>
</compile_context>

<pallas_src>
import math
import functools

import numpy as np
import jax
import jax.numpy as jnp
from jax import lax
from jax.experimental import pallas as pl
from jax.experimental.pallas import tpu as pltpu


def _erf(x):
    """Abramowitz & Stegun 7.1.26 rational erf approximation (max abs err ~1.5e-7)."""
    p = 0.3275911
    a1, a2, a3, a4, a5 = (0.254829592, -0.284496736, 1.421413741,
                          -1.453152027, 1.061405429)
    ax = jnp.abs(x)
    t = 1.0 / (1.0 + p * ax)
    poly = ((((a5 * t + a4) * t + a3) * t + a2) * t + a1) * t
    e = 1.0 - poly * jnp.exp(-(ax * ax))
    return jnp.where(x < 0.0, -e, e)


def _head_transform_kernel(x_ref, w_ref, b_ref, gamma_ref, beta_ref, o_ref,
                           *, eps, inv_e):
    """One (tm, H) row tile per grid step. Dense -> GELU -> LayerNorm, single store."""
    x = x_ref[...]                                       # (tm, H)
    w = w_ref[...]                                       # (H, E), stored (in, out)

    # Dense projection: one MXU pass, f32 accumulation.
    y = jnp.dot(x, w, preferred_element_type=jnp.float32) + b_ref[...]   # (tm, E)

    # Exact (erf-based) GELU.
    y = 0.5 * y * (1.0 + _erf(y * (1.0 / math.sqrt(2.0))))

    # LayerNorm over the embedding (lane) dimension.
    mu = jnp.sum(y, axis=-1, keepdims=True) * inv_e
    yc = y - mu
    var = jnp.sum(yc * yc, axis=-1, keepdims=True) * inv_e
    inv_std = lax.rsqrt(var + eps)                       # EUP, no vector divide

    # Single lane-dense output store for the whole tile.
    o_ref[...] = ((yc * inv_std) * gamma_ref[...] + beta_ref[...]).astype(o_ref.dtype)


def _pick_row_tile(m, max_rows=512):
    """Largest row tile <= max_rows that evenly divides m (full m if m is small)."""
    if m <= max_rows:
        return m
    for tm in (512, 256, 128, 64, 32, 16, 8):
        if tm <= max_rows and m % tm == 0:
            return tm
    return m  # fall back: single block


def former_prediction_head_transform(x, w, b, gamma, beta, *, eps=1e-12,
                                      max_block_rows=512):
    """x: (B, S, H); w: (H, E) stored as (in, out) so y = x @ w + b."""
    B, S, H = x.shape
    E = w.shape[1]
    M = B * S
    tm = _pick_row_tile(M, max_block_rows)

    x2 = x.reshape(M, H)
    b2 = b.reshape(1, E)
    g2 = gamma.reshape(1, E)
    beta2 = beta.reshape(1, E)

    kernel = functools.partial(_head_transform_kernel, eps=eps, inv_e=1.0 / E)

    out = pl.pallas_call(
        kernel,
        out_shape=jax.ShapeDtypeStruct((M, E), x.dtype),
        grid=(M // tm,),
        in_specs=[
            pl.BlockSpec((tm, H), lambda i: (i, 0)),   # hidden_states row tile
            pl.BlockSpec((H, E), lambda i: (0, 0)),    # dense weight (grid-invariant)
            pl.BlockSpec((1, E), lambda i: (0, 0)),    # dense bias
            pl.BlockSpec((1, E), lambda i: (0, 0)),    # LayerNorm gamma
            pl.BlockSpec((1, E), lambda i: (0, 0)),    # LayerNorm beta
        ],
        out_specs=pl.BlockSpec((tm, E), lambda i: (i, 0)),
        compiler_params=pltpu.CompilerParams(
            dimension_semantics=("parallel",),
        ),
    )(x2, w, b2, g2, beta2)
    return out.reshape(B, S, E)


# ---------------- pure-JAX reference (for correctness check) ----------------

def reference(x, w, b, gamma, beta, eps):
    y = jnp.einsum('bsh,he->bse', x, w) + b.reshape(1, 1, -1)
    y = jax.nn.gelu(y, approximate=False)                 # exact erf-based GELU
    mu = jnp.mean(y, axis=-1, keepdims=True)
    var = jnp.mean((y - mu) ** 2, axis=-1, keepdims=True)
    return (y - mu) / jnp.sqrt(var + eps) * gamma.reshape(1, 1, -1) + beta.reshape(1, 1, -1)


if __name__ == "__main__":
    B, S, H, E = 2, 8, 32, 32     # batch, seq_len, hidden_size, embedding_size
    eps = 1e-12                    # BERT-style layer_norm_eps

    key = jax.random.PRNGKey(0)
    ks = jax.random.split(key, 5)
    x = jax.random.normal(ks[0], (B, S, H), jnp.float32)
    w = jax.random.normal(ks[1], (H, E), jnp.float32) * 0.1   # stored (in, out)
    b = jax.random.normal(ks[2], (1, E), jnp.float32) * 0.1
    gamma = 1.0 + 0.1 * jax.random.normal(ks[3], (1, E), jnp.float32)
    beta = 0.1 * jax.random.normal(ks[4], (1, E), jnp.float32)

    out = former_prediction_head_transform(x, w, b, gamma, beta, eps=eps)
    out = jax.block_until_ready(out)

    ref = reference(x, w, b, gamma, beta, eps)
    ref = jax.block_until_ready(ref)

    assert out.shape == (B, S, E)
    assert np.allclose(np.asarray(out), np.asarray(ref), atol=1e-4, rtol=1e-4), \
        "Pallas kernel output does not match reference"
    print("KERNEL_OK")
</pallas_src>

<mosaic_0001>
module attributes {stable_mosaic.version = 11 : i64} {
  func.func @_head_transform_kernel(%arg0: i32, %arg1: memref<16x32xf32, #tpu.memory_space<vmem>>, %arg2: memref<32x32xf32, #tpu.memory_space<vmem>>, %arg3: memref<1x32xf32, #tpu.memory_space<vmem>>, %arg4: memref<1x32xf32, #tpu.memory_space<vmem>>, %arg5: memref<1x32xf32, #tpu.memory_space<vmem>>, %arg6: memref<16x32xf32, #tpu.memory_space<vmem>>) attributes {dimension_semantics = [#tpu.dimension_semantics<parallel>], iteration_bounds = array<i64: 1>, scalar_prefetch = 0 : i64, scratch_operands = 0 : i64, tpu.core_type = #tpu.core_type<tc>, window_params = [{transform_indices = @transform_0, window_bounds = array<i64: 16, 32>}, {pipeline_mode = #tpu.pipeline_mode<synchronous>, transform_indices = @transform_1, window_bounds = array<i64: 32, 32>}, {pipeline_mode = #tpu.pipeline_mode<synchronous>, transform_indices = @transform_2, window_bounds = array<i64: 1, 32>}, {pipeline_mode = #tpu.pipeline_mode<synchronous>, transform_indices = @transform_3, window_bounds = array<i64: 1, 32>}, {pipeline_mode = #tpu.pipeline_mode<synchronous>, transform_indices = @transform_4, window_bounds = array<i64: 1, 32>}, {transform_indices = @transform_5, window_bounds = array<i64: 16, 32>}]} {
    %c0 = arith.constant 0 : index
    %c0_0 = arith.constant 0 : index
    %0 = vector.load %arg1[%c0, %c0_0] : memref<16x32xf32, #tpu.memory_space<vmem>>, vector<16x32xf32>
    %c0_1 = arith.constant 0 : index
    %c0_2 = arith.constant 0 : index
    %1 = vector.load %arg2[%c0_1, %c0_2] : memref<32x32xf32, #tpu.memory_space<vmem>>, vector<32x32xf32>
    %cst = arith.constant dense<0.000000e+00> : vector<16x32xf32>
    %2 = tpu.matmul %0, %1, %cst {dimension_numbers = #tpu.dot_dimension_numbers<[1], [0], [0], [1], [0, 0, 1, 1], [], []>} : vector<16x32xf32>, vector<32x32xf32>, vector<16x32xf32> -> vector<16x32xf32>
    %c0_3 = arith.constant 0 : index
    %c0_4 = arith.constant 0 : index
    %3 = vector.load %arg3[%c0_3, %c0_4] : memref<1x32xf32, #tpu.memory_space<vmem>>, vector<1x32xf32>
    %4 = vector.broadcast %3 : vector<1x32xf32> to vector<16x32xf32>
    %5 = arith.addf %2, %4 : vector<16x32xf32>
    %cst_5 = arith.constant 5.000000e-01 : f32
    %6 = vector.broadcast %cst_5 : f32 to vector<16x32xf32>
    %7 = arith.mulf %6, %5 : vector<16x32xf32>
    %cst_6 = arith.constant 0.707106769 : f32
    %8 = vector.broadcast %cst_6 : f32 to vector<16x32xf32>
    %9 = arith.mulf %5, %8 : vector<16x32xf32>
    %10 = math.absf %9 : vector<16x32xf32>
    %cst_7 = arith.constant 0.327591091 : f32
    %11 = vector.broadcast %cst_7 : f32 to vector<16x32xf32>
    %12 = arith.mulf %11, %10 : vector<16x32xf32>
    %cst_8 = arith.constant 1.000000e+00 : f32
    %13 = vector.broadcast %cst_8 : f32 to vector<16x32xf32>
    %14 = arith.addf %13, %12 : vector<16x32xf32>
    %cst_9 = arith.constant 1.000000e+00 : f32
    %15 = vector.broadcast %cst_9 : f32 to vector<16x32xf32>
    %16 = arith.divf %15, %14 : vector<16x32xf32>
    %cst_10 = arith.constant 1.06140542 : f32
    %17 = vector.broadcast %cst_10 : f32 to vector<16x32xf32>
    %18 = arith.mulf %17, %16 : vector<16x32xf32>
    %cst_11 = arith.constant -1.45315206 : f32
    %19 = vector.broadcast %cst_11 : f32 to vector<16x32xf32>
    %20 = arith.addf %18, %19 : vector<16x32xf32>
    %21 = arith.mulf %20, %16 : vector<16x32xf32>
    %cst_12 = arith.constant 1.42141378 : f32
    %22 = vector.broadcast %cst_12 : f32 to vector<16x32xf32>
    %23 = arith.addf %21, %22 : vector<16x32xf32>
    %24 = arith.mulf %23, %16 : vector<16x32xf32>
    %cst_13 = arith.constant -0.284496725 : f32
    %25 = vector.broadcast %cst_13 : f32 to vector<16x32xf32>
    %26 = arith.addf %24, %25 : vector<16x32xf32>
    %27 = arith.mulf %26, %16 : vector<16x32xf32>
    %cst_14 = arith.constant 0.254829586 : f32
    %28 = vector.broadcast %cst_14 : f32 to vector<16x32xf32>
    %29 = arith.addf %27, %28 : vector<16x32xf32>
    %30 = arith.mulf %29, %16 : vector<16x32xf32>
    %31 = arith.mulf %10, %10 : vector<16x32xf32>
    %cst_15 = arith.constant 0.000000e+00 : f32
    %32 = vector.broadcast %cst_15 : f32 to vector<16x32xf32>
    %33 = arith.subf %32, %31 : vector<16x32xf32>
    %34 = math.exp %33 : vector<16x32xf32>
    %35 = arith.mulf %30, %34 : vector<16x32xf32>
    %cst_16 = arith.constant 1.000000e+00 : f32
    %36 = vector.broadcast %cst_16 : f32 to vector<16x32xf32>
    %37 = arith.subf %36, %35 : vector<16x32xf32>
    %cst_17 = arith.constant 0.000000e+00 : f32
    %38 = vector.broadcast %cst_17 : f32 to vector<16x32xf32>
    %39 = arith.cmpf olt, %9, %38 : vector<16x32xf32>
    %cst_18 = arith.constant 0.000000e+00 : f32
    %40 = vector.broadcast %cst_18 : f32 to vector<16x32xf32>
    %41 = arith.subf %40, %37 : vector<16x32xf32>
    %42 = arith.select %39, %41, %37 : vector<16x32xi1>, vector<16x32xf32>
    %cst_19 = arith.constant 1.000000e+00 : f32
    %43 = vector.broadcast %cst_19 : f32 to vector<16x32xf32>
    %44 = arith.addf %43, %42 : vector<16x32xf32>
    %45 = arith.mulf %7, %44 : vector<16x32xf32>
    %cst_20 = arith.constant dense<0.000000e+00> : vector<16xf32>
    %46 = vector.multi_reduction <add>, %45, %cst_20 [1] : vector<16x32xf32> to vector<16xf32>
    %47 = vector.shape_cast %46 : vector<16xf32> to vector<16x1xf32>
    %cst_21 = arith.constant 3.125000e-02 : f32
    %48 = vector.broadcast %cst_21 : f32 to vector<16x1xf32>
    %49 = arith.mulf %47, %48 : vector<16x1xf32>
    %50 = vector.broadcast %49 : vector<16x1xf32> to vector<16x32xf32>
    %51 = arith.subf %45, %50 : vector<16x32xf32>
    %52 = arith.mulf %51, %51 : vector<16x32xf32>
    %cst_22 = arith.constant dense<0.000000e+00> : vector<16xf32>
    %53 = vector.multi_reduction <add>, %52, %cst_22 [1] : vector<16x32xf32> to vector<16xf32>
    %54 = vector.shape_cast %53 : vector<16xf32> to vector<16x1xf32>
    %cst_23 = arith.constant 3.125000e-02 : f32
    %55 = vector.broadcast %cst_23 : f32 to vector<16x1xf32>
    %56 = arith.mulf %54, %55 : vector<16x1xf32>
    %cst_24 = arith.constant 9.99999996E-13 : f32
    %57 = vector.broadcast %cst_24 : f32 to vector<16x1xf32>
    %58 = arith.addf %56, %57 : vector<16x1xf32>
    %59 = math.rsqrt %58 : vector<16x1xf32>
    %60 = vector.broadcast %59 : vector<16x1xf32> to vector<16x32xf32>
    %61 = arith.mulf %51, %60 : vector<16x32xf32>
    %c0_25 = arith.constant 0 : index
    %c0_26 = arith.constant 0 : index
    %62 = vector.load %arg4[%c0_25, %c0_26] : memref<1x32xf32, #tpu.memory_space<vmem>>, vector<1x32xf32>
    %63 = vector.broadcast %62 : vector<1x32xf32> to vector<16x32xf32>
    %64 = arith.mulf %61, %63 : vector<16x32xf32>
    %c0_27 = arith.constant 0 : index
    %c0_28 = arith.constant 0 : index
    %65 = vector.load %arg5[%c0_27, %c0_28] : memref<1x32xf32, #tpu.memory_space<vmem>>, vector<1x32xf32>
    %66 = vector.broadcast %65 : vector<1x32xf32> to vector<16x32xf32>
    %67 = arith.addf %64, %66 : vector<16x32xf32>
    %c0_29 = arith.constant 0 : index
    %c0_30 = arith.constant 0 : index
    %68 = vector.load %arg6[%c0_29, %c0_30] : memref<16x32xf32, #tpu.memory_space<vmem>>, vector<16x32xf32>
    tpu.vector_store %arg6[%c0_29, %c0_30], %67 {strides = array<i32>} : memref<16x32xf32, #tpu.memory_space<vmem>>, vector<16x32xf32>,
    return
  }
  func.func @transform_0(%arg0: i32) -> (i32, i32) {
    %c0_i32 = arith.constant 0 : i32
    %c0_i32_0 = arith.constant 0 : i32
    return %arg0, %c0_i32 : i32, i32
  }
  func.func @transform_1(%arg0: i32) -> (i32, i32) {
    %c0_i32 = arith.constant 0 : i32
    %c0_i32_0 = arith.constant 0 : i32
    %c0_i32_1 = arith.constant 0 : i32
    return %c0_i32, %c0_i32_0 : i32, i32
  }
  func.func @transform_2(%arg0: i32) -> (i32, i32) {
    %c0_i32 = arith.constant 0 : i32
    %c0_i32_0 = arith.constant 0 : i32
    %c0_i32_1 = arith.constant 0 : i32
    return %c0_i32, %c0_i32_0 : i32, i32
  }
  func.func @transform_3(%arg0: i32) -> (i32, i32) {
    %c0_i32 = arith.constant 0 : i32
    %c0_i32_0 = arith.constant 0 : i32
    %c0_i32_1 = arith.constant 0 : i32
    return %c0_i32, %c0_i32_0 : i32, i32
  }
  func.func @transform_4(%arg0: i32) -> (i32, i32) {
    %c0_i32 = arith.constant 0 : i32
    %c0_i32_0 = arith.constant 0 : i32
    %c0_i32_1 = arith.constant 0 : i32
    return %c0_i32, %c0_i32_0 : i32, i32
  }
  func.func @transform_5(%arg0: i32) -> (i32, i32) {
    %c0_i32 = arith.constant 0 : i32
    %c0_i32_0 = arith.constant 0 : i32
    return %arg0, %c0_i32 : i32, i32
  }
}

</mosaic_0001>

<llo_original>
// kernel: tpu_custom_call.1
$region0: #{tpu_custom_call.1}
  #allocation0 [shape = 'u32[]', space=smem, size = 0x4, offset = 0x4, fixed_abs, tag = 'smem constant byte address 0x4 - core index']
  #allocation1 [shape = 'u32[72,128]{1,0:T(1,128)}', space=vmem, size = 0x9000, scoped, tag = 'internal scratch']
  %s0 = inlined_call_operand.hbm [shape: f32[16,32], index: 0, kind: input, shape index: {}]
  %s1 = inlined_call_operand.hbm [shape: f32[32,32], index: 1, kind: input, shape index: {}]
  %s2 = inlined_call_operand.vmem [shape: f32[1,32], index: 2, kind: input, shape index: {}]
  %s3 = inlined_call_operand.vmem [shape: f32[1,32], index: 3, kind: input, shape index: {}]
  %s4 = inlined_call_operand.vmem [shape: f32[1,32], index: 4, kind: input, shape index: {}]
  %s5 = inlined_call_operand.hbm [shape: f32[16,32], index: 5, kind: output, shape index: {}]
  %s6 = sld [smem:[#allocation0]]
  $region38: #{tpu_custom_call.1} parent=0
    _
  %s8 = ssub.s32 1, %s6
  %s9 = scalar_select 0, %s8, %s6
  $region1: #{tpu_custom_call.1} parent=0
    #allocation2 [shape = 'u8[8192]{0}', space=vmem, size = 0x2000, scoped, tag = 'input window, operand 0, single buffered']
    #allocation3 [shape = 's32[1]{0}', space=sflag, size = 0x4, scoped, tag = 'scoped memory for tpu_custom_call.1']
    #allocation4 [shape = 's32[1]{0}', space=sflag, size = 0x4, scoped, tag = 'scoped memory for tpu_custom_call.1']
    #allocation5 [shape = 'u8[16384]{0}', space=vmem, size = 0x4000, scoped, tag = 'input window, operand 1, single buffered']
    #allocation6 [shape = 's32[1]{0}', space=sflag, size = 0x4, scoped, tag = 'scoped memory for tpu_custom_call.1']
    #allocation7 [shape = 'u8[8192]{0}', space=vmem, size = 0x2000, scoped, tag = 'output window, operand 0, single buffered']
    %10 = vsyncpa [#allocation3], 0
    %11 = vsyncpa [#allocation6], 0
    %12 = vsyncpa [#allocation4], 0
    // Predicated region
    $region2: #{tpu_custom_call.1} parent=1 // pred_check
      _
    $region3: #{tpu_custom_call.1} parent=1 // pred_check_branch
      %14 = sbr.rel (0) target = $region5
    $region4: #{tpu_custom_call.1} parent=1 // pred_region
      %16 = vsyncadd [#allocation3], 0
      %s17 = sshll.u32 %s0, 4
      %s18 = int_to_ptr.hbm [resolvable:$true] %s17
      %s19 = sshll.u32 [#allocation2], 4
      %s20 = int_to_ptr.vmem [resolvable:$true] %s19
      %25 = dma.hbm_to_vmem [thread:$0]  %s18, 256, %s20, [#allocation3], 128, 128, 8
    $region5: #{tpu_custom_call.1} parent=1 // pred_fallthru
      _
    // Predicated region
    $region6: #{tpu_custom_call.1} parent=1 // pred_check
      _
    $region7: #{tpu_custom_call.1} parent=1 // pred_check_branch
      %27 = sbr.rel (0) target = $region9
    $region8: #{tpu_custom_call.1} parent=1 // pred_region
      %29 = vsyncadd [#allocation6], 0
      %s30 = sshll.u32 %s1, 4
      %s31 = int_to_ptr.hbm [resolvable:$true] %s30
      %s32 = sshll.u32 [#allocation5], 4
      %s33 = int_to_ptr.vmem [resolvable:$true] %s32
      %38 = dma.hbm_to_vmem [thread:$0]  %s31, 512, %s33, [#allocation6], 128, 128, 8
    $region9: #{tpu_custom_call.1} parent=1 // pred_fallthru
      _
    // Predicated region
    $region10: #{tpu_custom_call.1} parent=1 // pred_check
      _
    $region11: #{tpu_custom_call.1} parent=1 // pred_check_branch
      %40 = sbr.rel (0) target = $region13
    $region12: #{tpu_custom_call.1} parent=1 // pred_region
      _
    $region13: #{tpu_custom_call.1} parent=1 // pred_fallthru
      _
    // Predicated region
    $region14: #{tpu_custom_call.1} parent=1 // pred_check
      _
    $region15: #{tpu_custom_call.1} parent=1 // pred_check_branch
      %42 = sbr.rel (0) target = $region17
    $region16: #{tpu_custom_call.1} parent=1 // pred_region
      _
    $region17: #{tpu_custom_call.1} parent=1 // pred_fallthru
      _
    // Predicated region
    $region18: #{tpu_custom_call.1} parent=1 // pred_check
      _
    $region19: #{tpu_custom_call.1} parent=1 // pred_check_branch
      %44 = sbr.rel (0) target = $region21
    $region20: #{tpu_custom_call.1} parent=1 // pred_region
      _
    $region21: #{tpu_custom_call.1} parent=1 // pred_fallthru
      _
    // Predicated region
    $region22: #{tpu_custom_call.1} parent=1 // pred_check
      _
    $region23: #{tpu_custom_call.1} parent=1 // pred_check_branch
      %46 = sbr.rel (0) target = $region25
    $region24: #{tpu_custom_call.1} parent=1 // pred_region
      %48 = dma.done [#allocation3], 256
    $region25: #{tpu_custom_call.1} parent=1 // pred_fallthru
      _
    // Predicated region
    $region26: #{tpu_custom_call.1} parent=1 // pred_check
      _
    $region27: #{tpu_custom_call.1} parent=1 // pred_check_branch
      %50 = sbr.rel (0) target = $region29
    $region28: #{tpu_custom_call.1} parent=1 // pred_region
      %52 = dma.done [#allocation6], 512
    $region29: #{tpu_custom_call.1} parent=1 // pred_fallthru
      _
    %v53 = vld [vmem:[#allocation2] sm:$0xff]
    %v54 = vld [vmem:[#allocation2 + $0x8] sm:$0xff]
    %v55 = vld [vmem:[#allocation5] sm:$0xff]
    %v56 = vld [vmem:[#allocation5 + $0x8] sm:$0xff]
    %v57 = vld [vmem:[#allocation5 + $0x10] sm:$0xff]
    %v58 = vld [vmem:[#allocation5 + $0x18] sm:$0xff]
    %v59 = vld [vmem:[%s2] sm:$0x1]
    %v61 = vperm.slane %v59, 0
    %vm63 = vcmask 261120
    %v65 = vsel %vm63, %v53, 0
    %v68 = vsel %vm63, %v54, 0
    %70 = vmatpush.msra.mxu0 0.0
    %71 = vmatpush.msra.mxu0 0.0
    %72 = vmatpush.msra.mxu0 0.0
    %73 = vmatpush.msra.mxu0 0.0
    %74 = vmatpush.msra.mxu0 0.0
    %75 = vmatpush.msra.mxu0 0.0
    %76 = vmatpush.msra.mxu0 0.0
    %77 = vmatpush.msra.mxu0 0.0
    %78 = vmatpush.msra.mxu0 0.0
    %79 = vmatpush.msra.mxu0 0.0
    %80 = vmatpush.msra.mxu0 0.0
    %81 = vmatpush.msra.mxu0 0.0
    %82 = vmatpush.msra.mxu0 %v58
    %83 = vmatpush.msra.mxu0 %v57
    %84 = vmatpush.msra.mxu0 %v56
    %85 = vmatpush.msra.mxu0 %v55
    %86 = vmatmul.f32.gmra.mxu0 %v65
    %v87 = vpop.f32.mrf.mxu0
    %v88 = vadd.f32 %v61, %v87
    %89 = vmatmul.f32.gmra.mxu0 %v68
    %v90 = vpop.f32.mrf.mxu0
    %v91 = vadd.f32 %v61, %v90
    %92 = vdwg.mxu0
    %v93 = vmul.f32 %v88, 0.5
    %v94 = vmul.f32 %v91, 0.5
    %v95 = vmul.f32 %v88, 0.70710677
    %v96 = vmul.f32 %v91, 0.70710677
    %v97 = vand.u32 2147483647, %v95
    %v98 = vand.u32 2147483647, %v96
    %v99 = vmul.f32 %v97, 0.3275911
    %v100 = vmul.f32 %v98, 0.3275911
    %v101 = vadd.f32 %v99, 1.0
    %v102 = vadd.f32 %v100, 1.0
    %v103 = vrcp.pop %v101
    %v104 = vmul.f32 %v101, %v103
    %v105 = vsub.f32 1.0, %v104
    %v106 = vmul.f32 %v103, %v105
    %v107 = vadd.f32 %v103, %v106
    %vm108 = vweird.f32 %v101
    %vm109 = vweird.f32 %v103
    %vm110 = vmor %vm108, %vm109
    %v111 = vsel %vm110, %v103, %v107
    %v112 = vand.u32 2147483647, %v101
    %vm113 = vcmp.eq.f32.partialorder %v112, 8.507059e+37
    %v114 = vand.u32 %v101, 2147483648
    %v115 = vor.u32 1.1754944e-38, %v114
    %v116 = vsel %vm113, %v115, %v111
    %v117 = vmul.f32 1.0, %v116
    %v118 = vrcp.pop %v102
    %v119 = vmul.f32 %v102, %v118
    %v120 = vsub.f32 1.0, %v119
    %v121 = vmul.f32 %v118, %v120
    %v122 = vadd.f32 %v118, %v121
    %vm123 = vweird.f32 %v102
    %vm124 = vweird.f32 %v118
    %vm125 = vmor %vm123, %vm124
    %v126 = vsel %vm125, %v118, %v122
    %v127 = vand.u32 2147483647, %v102
    %vm128 = vcmp.eq.f32.partialorder %v127, 8.507059e+37
    %v129 = vand.u32 %v102, 2147483648
    %v130 = vor.u32 1.1754944e-38, %v129
    %v131 = vsel %vm128, %v130, %v126
    %v132 = vmul.f32 1.0, %v131
    %v133 = vmul.f32 %v117, 1.0614054
    %v134 = vmul.f32 %v132, 1.0614054
    %v135 = vadd.f32 %v133, -1.4531521
    %v136 = vadd.f32 %v134, -1.4531521
    %v137 = vmul.f32 %v135, %v117
    %v138 = vmul.f32 %v136, %v132
    %v139 = vadd.f32 %v137, 1.4214138
    %v140 = vadd.f32 %v138, 1.4214138
    %v141 = vmul.f32 %v139, %v117
    %v142 = vmul.f32 %v140, %v132
    %v143 = vadd.f32 %v141, -0.28449672
    %v144 = vadd.f32 %v142, -0.28449672
    %v145 = vmul.f32 %v143, %v117
    %v146 = vmul.f32 %v144, %v132
    %v147 = vadd.f32 %v145, 0.2548296
    %v148 = vadd.f32 %v146, 0.2548296
    %v149 = vmul.f32 %v147, %v117
    %v150 = vmul.f32 %v148, %v132
    %v151 = vmul.f32 %v97, %v97
    %v152 = vmul.f32 %v98, %v98
    %v153 = vsub.f32 0.0, %v151
    %v154 = vsub.f32 0.0, %v152
    %v155 = vmul.f32 %v153, 1.442695
    %v156 = vpow.pop %v155
    %v157 = vmul.f32 %v154, 1.442695
    %v158 = vpow.pop %v157
    %v159 = vmul.f32 %v149, %v156
    %v160 = vmul.f32 %v150, %v158
    %v161 = vsub.f32 1.0, %v159
    %v162 = vsub.f32 1.0, %v160
    %vm163 = vcmp.lt.f32.partialorder %v95, 0.0
    %vm164 = vcmp.lt.f32.partialorder %v96, 0.0
    %v165 = vsub.f32 0.0, %v161
    %v166 = vsub.f32 0.0, %v162
    %v167 = vsel %vm163, %v165, %v161
    %v168 = vsel %vm164, %v166, %v162
    %v169 = vadd.f32 %v167, 1.0
    %v170 = vadd.f32 %v168, 1.0
    %v171 = vmul.f32 %v93, %v169
    %v172 = vmul.f32 %v94, %v170
    %v173 = vsel %vm63, %v171, 0.0
    %174 = vadd.xlane.f32.xlu0 %v173
    %v175 = vpop.xlane.xlu0 %174
    %v176 = vsel %vm63, %v172, 0.0
    %177 = vadd.xlane.f32.xlu0 %v176
    %v178 = vpop.xlane.xlu0 %177
    %v179 = vmul.f32 %v175, 0.03125
    %v180 = vmul.f32 %v178, 0.03125
    %v181 = vsub.f32 %v171, %v179
    %v182 = vsub.f32 %v172, %v180
    %v183 = vmul.f32 %v181, %v181
    %v184 = vmul.f32 %v182, %v182
    %v185 = vsel %vm63, %v183, 0.0
    %186 = vadd.xlane.f32.xlu0 %v185
    %v187 = vpop.xlane.xlu0 %186
    %v188 = vsel %vm63, %v184, 0.0
    %189 = vadd.xlane.f32.xlu0 %v188
    %v190 = vpop.xlane.xlu0 %189
    %v191 = vmul.f32 %v187, 0.03125
    %v192 = vmul.f32 %v190, 0.03125
    %v193 = vadd.f32 %v191, 1e-12
    %v194 = vadd.f32 %v192, 1e-12
    %v195 = vrsqrt.pop %v193
    %v196 = vmul.f32 %v195, %v193
    %v197 = vmul.f32 %v196, %v195
    %v198 = vmul.f32 0.5, %v197
    %v199 = vsub.f32 1.5, %v198
    %v200 = vmul.f32 %v195, %v199
    %vm201 = vweird.f32 %v193
    %vm202 = vweird.f32 %v195
    %vm203 = vmor %vm201, %vm202
    %v204 = vsel %vm203, %v195, %v200
    %v205 = vrsqrt.pop %v194
    %v206 = vmul.f32 %v205, %v194
    %v207 = vmul.f32 %v206, %v205
    %v208 = vmul.f32 0.5, %v207
    %v209 = vsub.f32 1.5, %v208
    %v210 = vmul.f32 %v205, %v209
    %vm211 = vweird.f32 %v194
    %vm212 = vweird.f32 %v205
    %vm213 = vmor %vm211, %vm212
    %v214 = vsel %vm213, %v205, %v210
    %v215 = vmul.f32 %v181, %v204
    %v216 = vmul.f32 %v182, %v214
    %v217 = vld [vmem:[%s3] sm:$0x1]
    %v219 = vperm.slane %v217, 0
    %v221 = vmul.f32 %v215, %v219
    %v222 = vmul.f32 %v216, %v219
    %v223 = vld [vmem:[%s4] sm:$0x1]
    %v225 = vperm.slane %v223, 0
    %v227 = vadd.f32 %v221, %v225
    %v228 = vadd.f32 %v222, %v225
    %229 = vst.msk [vmem:[#allocation7] sm:$0xff] %vm63, %v227
    %230 = vst.msk [vmem:[#allocation7 + $0x8] sm:$0xff] %vm63, %v228
    // Predicated region
    $region30: #{tpu_custom_call.1} parent=1 // pred_check
      _
    $region31: #{tpu_custom_call.1} parent=1 // pred_check_branch
      %232 = sbr.rel (0) target = $region33
    $region32: #{tpu_custom_call.1} parent=1 // pred_region
      %234 = vsyncadd [#allocation4], 0
      %s235 = sshll.u32 [#allocation7], 4
      %s236 = int_to_ptr.vmem [resolvable:$true] %s235
      %s237 = sshll.u32 %s5, 4
      %s238 = int_to_ptr.hbm [resolvable:$true] %s237
      %243 = dma.vmem_to_hbm [thread:$0]  %s236, 256, %s238, [#allocation4], 128, 128, 8
    $region33: #{tpu_custom_call.1} parent=1 // pred_fallthru
      _
    // Predicated region
    $region34: #{tpu_custom_call.1} parent=1 // pred_check
      _
    $region35: #{tpu_custom_call.1} parent=1 // pred_check_branch
      %245 = sbr.rel (0) target = $region37
    $region36: #{tpu_custom_call.1} parent=1 // pred_region
      %247 = dma.done [#allocation4], 256
    $region37: #{tpu_custom_call.1} parent=1 // pred_fallthru
      _
    %248 = vsyncpa [#allocation3], 1
    %249 = vsyncpa [#allocation6], 1
    %250 = vsyncpa [#allocation4], 1

</llo_original>
